<compile_context>
chip_gen: v6e
topology: v6e:2x2x1
jax: 0.10.0
libtpu: 0.0.40
codegen_flags: <defaults>
</compile_context>

<pallas_src>
import jax
import jax.numpy as jnp
from jax.experimental import pallas as pl
from jax.experimental.pallas import tpu as pltpu


def _round_up(x, m):
    return (x + m - 1) // m * m


def _vmem_budget():
    """Return (big_vmem, vmem_limit_bytes) based on the actual chip."""
    cap = 64 * 1024 * 1024  # conservative default: v7x per-TC VMEM
    try:
        cap = int(getattr(pltpu.get_tpu_info(), "vmem_capacity_bytes", cap))
    except Exception:
        pass
    big = cap >= 96 * 1024 * 1024  # v5e / v6e: 128 MiB; v7x: 64 MiB
    # 64 MiB scoped limit on big-VMEM parts, 48 MiB on v7x (leave headroom
    # for compiler scratch out of the 64 MiB physical VMEM).
    return big, (64 if big else 48) * 1024 * 1024


def _is_dual_tensorcore():
    """True only on chips with 2 TensorCores per device (v7x)."""
    try:
        return "v7" in jax.devices()[0].device_kind.lower()
    except Exception:
        return False


def _choose_tiles(M, N, K, big_vmem):
    m128, n128, k128 = _round_up(M, 128), _round_up(N, 128), _round_up(K, 128)
    # 1024x1024xf32 acc + double-buffered bf16 inputs/outputs ~= 12 MiB: fits
    # every generation. Go to 2048 only on 128-MiB-VMEM chips for huge shapes
    # (~40 MiB working set), never on v7x.
    mn_target = 2048 if (big_vmem and m128 >= 2048 and n128 >= 2048) else 1024
    tm = min(mn_target, m128)
    tn = min(mn_target, n128)
    if k128 <= 1024:
        tk = k128            # whole reduction in one block -> no-scratch path
    else:
        tk = 512             # stream K; multiple of 256 (full MXU depth)
    return tm, tn, tk


def matmul_bf16_kernel(q_ref, k_ref, o_ref, acc_ref):
    # Zero the f32 accumulator at the start of the K reduction.
    @pl.when(pl.program_id(2) == 0)
    def _():
        acc_ref[...] = jnp.zeros_like(acc_ref)

    # bf16 x bf16 -> f32 accumulate on the MXU.
    acc_ref[...] += jnp.dot(
        q_ref[...], k_ref[...], preferred_element_type=jnp.float32
    )

    # Cast + write back on the last K step.
    @pl.when(pl.program_id(2) == pl.num_programs(2) - 1)
    def _():
        o_ref[...] = acc_ref[...].astype(o_ref.dtype)


def matmul_bf16_single_k_kernel(q_ref, k_ref, o_ref):
    # Whole K fits in one block: no scratch / accumulator round-trip needed.
    o_ref[...] = jnp.dot(
        q_ref[...], k_ref[...], preferred_element_type=jnp.float32
    ).astype(o_ref.dtype)


def custom_matmul_bf16(q, k):
    """Pallas TPU equivalent of torch.ops.custom_op.custom_matmul_bf16."""
    q = q.astype(jnp.bfloat16)
    k = k.astype(jnp.bfloat16)
    M, K = q.shape
    K2, N = k.shape
    assert K == K2, "inner dimensions must match"

    big_vmem, vmem_limit = _vmem_budget()
    tm, tn, tk = _choose_tiles(M, N, K, big_vmem)

    # Only on dual-TensorCore chips (v7x): when the parallel grid would
    # collapse to a single block, split it so both cores get work.
    if _is_dual_tensorcore() and pl.cdiv(M, tm) * pl.cdiv(N, tn) == 1:
        if tm >= 256:
            tm //= 2
        elif tn >= 256:
            tn //= 2

    Kp = _round_up(K, tk)
    grid_m = pl.cdiv(M, tm)
    grid_n = pl.cdiv(N, tn)
    grid_k = Kp // tk

    # Only K is zero-padded (a garbage K tail would corrupt valid outputs).
    # Ragged M / N edges are left to Pallas' masked edge loads / stores, so no
    # padded copies of the M/N extents and no output slice are needed.
    qp = q if Kp == K else jnp.pad(q, ((0, 0), (0, Kp - K)))
    kp = k if Kp == K else jnp.pad(k, ((0, Kp - K), (0, 0)))
    # TODO(synk): if a trace shows the K-pad copies mattering, enable
    # allow_input_fusion in CompilerParams so XLA fuses the pad into the call.

    # Advisory cost: A is re-read grid_n times, B grid_m times (bf16 = 2 B).
    cost = pl.CostEstimate(
        flops=2 * (grid_m * tm) * (grid_n * tn) * Kp,
        transcendentals=0,
        bytes_accessed=2 * (M * Kp * grid_n + Kp * N * grid_m + M * N),
    )

    if grid_k == 1:
        out = pl.pallas_call(
            matmul_bf16_single_k_kernel,
            out_shape=jax.ShapeDtypeStruct((M, N), jnp.bfloat16),
            grid_spec=pltpu.PrefetchScalarGridSpec(
                num_scalar_prefetch=0,
                grid=(grid_m, grid_n),
                in_specs=[
                    pl.BlockSpec((tm, Kp), lambda i, j: (i, 0)),
                    pl.BlockSpec((Kp, tn), lambda i, j: (0, j)),
                ],
                out_specs=pl.BlockSpec((tm, tn), lambda i, j: (i, j)),
            ),
            compiler_params=pltpu.CompilerParams(
                dimension_semantics=("parallel", "parallel"),
                vmem_limit_bytes=vmem_limit,
            ),
            cost_estimate=cost,
        )(qp, kp)
    else:
        out = pl.pallas_call(
            matmul_bf16_kernel,
            out_shape=jax.ShapeDtypeStruct((M, N), jnp.bfloat16),
            grid_spec=pltpu.PrefetchScalarGridSpec(
                num_scalar_prefetch=0,
                grid=(grid_m, grid_n, grid_k),
                in_specs=[
                    pl.BlockSpec((tm, tk), lambda i, j, kk: (i, kk)),
                    pl.BlockSpec((tk, tn), lambda i, j, kk: (kk, j)),
                ],
                out_specs=pl.BlockSpec((tm, tn), lambda i, j, kk: (i, j)),
                scratch_shapes=[pltpu.VMEM((tm, tn), jnp.float32)],
            ),
            compiler_params=pltpu.CompilerParams(
                dimension_semantics=("parallel", "parallel", "arbitrary"),
                vmem_limit_bytes=vmem_limit,
            ),
            cost_estimate=cost,
        )(qp, kp)

    return out


def _check(q, k):
    out = jax.block_until_ready(custom_matmul_bf16(q, k))
    ref = jnp.dot(
        q.astype(jnp.bfloat16),
        k.astype(jnp.bfloat16),
        preferred_element_type=jnp.float32,
    ).astype(jnp.bfloat16)
    assert out.shape == ref.shape and out.dtype == jnp.bfloat16
    assert jnp.allclose(
        out.astype(jnp.float32), ref.astype(jnp.float32), atol=1e-2, rtol=2e-2
    ), "mismatch vs reference"
    return out


if __name__ == "__main__":
    key = jax.random.PRNGKey(0)
    k1, k2, k3, k4 = jax.random.split(key, 4)

    # Aligned case: single-K fast path (K=512 -> one block), no padding at all.
    M, K, N = 256, 512, 256
    q = jax.random.normal(k1, (M, K), dtype=jnp.float32).astype(jnp.bfloat16)
    kmat = jax.random.normal(k2, (K, N), dtype=jnp.float32).astype(jnp.bfloat16)
    _check(q, kmat)

    # Unaligned case: K=1030 padded to 1536 (tk=512, 3 K steps, f32 acc path);
    # M=96 / N=160 are left ragged and handled by masked edge stores.
    M2, K2, N2 = 96, 1030, 160
    q2 = jax.random.normal(k3, (M2, K2), dtype=jnp.float32).astype(jnp.bfloat16)
    kmat2 = jax.random.normal(k4, (K2, N2), dtype=jnp.float32).astype(jnp.bfloat16)
    _check(q2, kmat2)

    print("KERNEL_OK")
</pallas_src>

<mosaic_0001>
module attributes {stable_mosaic.version = 11 : i64} {
  func.func @matmul_bf16_single_k_kernel(%arg0: i32, %arg1: i32, %arg2: memref<256x512xbf16, #tpu.memory_space<vmem>>, %arg3: memref<512x256xbf16, #tpu.memory_space<vmem>>, %arg4: memref<256x256xbf16, #tpu.memory_space<vmem>>) attributes {dimension_semantics = [#tpu.dimension_semantics<parallel>, #tpu.dimension_semantics<parallel>], iteration_bounds = array<i64: 1, 1>, scalar_prefetch = 0 : i64, scratch_operands = 0 : i64, tpu.core_type = #tpu.core_type<tc>, window_params = [{transform_indices = @transform_0, window_bounds = array<i64: 256, 512>}, {transform_indices = @transform_1, window_bounds = array<i64: 512, 256>}, {transform_indices = @transform_2, window_bounds = array<i64: 256, 256>}]} {
    %c0 = arith.constant 0 : index
    %c0_0 = arith.constant 0 : index
    %0 = vector.load %arg2[%c0, %c0_0] : memref<256x512xbf16, #tpu.memory_space<vmem>>, vector<256x512xbf16>
    %c0_1 = arith.constant 0 : index
    %c0_2 = arith.constant 0 : index
    %1 = vector.load %arg3[%c0_1, %c0_2] : memref<512x256xbf16, #tpu.memory_space<vmem>>, vector<512x256xbf16>
    %cst = arith.constant dense<0.000000e+00> : vector<256x256xf32>
    %2 = tpu.matmul %0, %1, %cst {dimension_numbers = #tpu.dot_dimension_numbers<[1], [0], [0], [1], [0, 0, 1, 1], [], []>} : vector<256x512xbf16>, vector<512x256xbf16>, vector<256x256xf32> -> vector<256x256xf32>
    %3 = arith.truncf %2 : vector<256x256xf32> to vector<256x256xbf16>
    %c0_3 = arith.constant 0 : index
    %c0_4 = arith.constant 0 : index
    %4 = vector.load %arg4[%c0_3, %c0_4] : memref<256x256xbf16, #tpu.memory_space<vmem>>, vector<256x256xbf16>
    tpu.vector_store %arg4[%c0_3, %c0_4], %3 {strides = array<i32>} : memref<256x256xbf16, #tpu.memory_space<vmem>>, vector<256x256xbf16>,
    return
  }
  func.func @transform_0(%arg0: i32, %arg1: i32) -> (i32, i32) {
    %c0_i32 = arith.constant 0 : i32
    %c0_i32_0 = arith.constant 0 : i32
    return %arg0, %c0_i32 : i32, i32
  }
  func.func @transform_1(%arg0: i32, %arg1: i32) -> (i32, i32) {
    %c0_i32 = arith.constant 0 : i32
    %c0_i32_0 = arith.constant 0 : i32
    return %c0_i32, %arg1 : i32, i32
  }
  func.func @transform_2(%arg0: i32, %arg1: i32) -> (i32, i32) {
    %c0_i32 = arith.constant 0 : i32
    return %arg0, %arg1 : i32, i32
  }
}

</mosaic_0001>

<llo_original>
// kernel: tpu_custom_call.1
$region0: #{tpu_custom_call.1}
  #allocation0 [shape = 'u32[]', space=smem, size = 0x4, offset = 0x4, fixed_abs, tag = 'smem constant byte address 0x4 - core index']
  #allocation1 [shape = 'u32[144,128]{1,0:T(1,128)}', space=vmem, size = 0x12000, scoped, tag = 'internal scratch']
  %s0 = inlined_call_operand.hbm [shape: bf16[256,512], index: 0, kind: input, shape index: {}]
  %s1 = inlined_call_operand.hbm [shape: bf16[512,256], index: 1, kind: input, shape index: {}]
  %s2 = inlined_call_operand.hbm [shape: bf16[256,256], index: 2, kind: output, shape index: {}]
  %s3 = sld [smem:[#allocation0]]
  $region26: #{tpu_custom_call.1} parent=0
    _
  %s5 = ssub.s32 1, %s3
  %s6 = scalar_select 0, %s5, %s3
  $region1: #{tpu_custom_call.1} parent=0
    #allocation2 [shape = 'u8[262144]{0}', space=vmem, size = 0x40000, scoped, tag = 'input window, operand 0, single buffered']
    #allocation3 [shape = 's32[1]{0}', space=sflag, size = 0x4, scoped, tag = 'scoped memory for tpu_custom_call.1']
    #allocation4 [shape = 's32[1]{0}', space=sflag, size = 0x4, scoped, tag = 'scoped memory for tpu_custom_call.1']
    #allocation5 [shape = 'u8[262144]{0}', space=vmem, size = 0x40000, scoped, tag = 'input window, operand 1, single buffered']
    #allocation6 [shape = 's32[1]{0}', space=sflag, size = 0x4, scoped, tag = 'scoped memory for tpu_custom_call.1']
    #allocation7 [shape = 'u8[131072]{0}', space=vmem, size = 0x20000, scoped, tag = 'output window, operand 0, single buffered']
    %7 = vsyncpa [#allocation3], 0
    %8 = vsyncpa [#allocation6], 0
    %9 = vsyncpa [#allocation4], 0
    // Predicated region
    $region2: #{tpu_custom_call.1} parent=1 // pred_check
      _
    $region3: #{tpu_custom_call.1} parent=1 // pred_check_branch
      %11 = sbr.rel (0) target = $region5
    $region4: #{tpu_custom_call.1} parent=1 // pred_region
      %s13 = ssub.s32 8192, 8192
      %14 = vsyncadd [#allocation3], %s13
      %s15 = sshll.u32 [#allocation2], 4
      %s16 = int_to_ptr.vmem [resolvable:$true] %s15
      %21 = dma.hbm_to_vmem [thread:$0]  %s0, 8192, %s16, [#allocation3], 256, 256, 16
    $region5: #{tpu_custom_call.1} parent=1 // pred_fallthru
      _
    // Predicated region
    $region6: #{tpu_custom_call.1} parent=1 // pred_check
      _
    $region7: #{tpu_custom_call.1} parent=1 // pred_check_branch
      %23 = sbr.rel (0) target = $region9
    $region8: #{tpu_custom_call.1} parent=1 // pred_region
      %s25 = ssub.s32 8192, 8192
      %26 = vsyncadd [#allocation6], %s25
      %s27 = sshll.u32 [#allocation5], 4
      %s28 = int_to_ptr.vmem [resolvable:$true] %s27
      %33 = dma.hbm_to_vmem [thread:$0]  %s1, 8192, %s28, [#allocation6], 128, 128, 8
    $region9: #{tpu_custom_call.1} parent=1 // pred_fallthru
      _
    // Predicated region
    $region10: #{tpu_custom_call.1} parent=1 // pred_check
      _
    $region11: #{tpu_custom_call.1} parent=1 // pred_check_branch
      %35 = sbr.rel (0) target = $region13
    $region12: #{tpu_custom_call.1} parent=1 // pred_region
      %36 = dma.done [#allocation3], 8192
    $region13: #{tpu_custom_call.1} parent=1 // pred_fallthru
      _
    // Predicated region
    $region14: #{tpu_custom_call.1} parent=1 // pred_check
      _
    $region15: #{tpu_custom_call.1} parent=1 // pred_check_branch
      %38 = sbr.rel (0) target = $region17
    $region16: #{tpu_custom_call.1} parent=1 // pred_region
      %39 = dma.done [#allocation6], 8192
    $region17: #{tpu_custom_call.1} parent=1 // pred_fallthru
      _
    %v40 = vld [vmem:[#allocation2] sm:$0xff]
    %v41 = vld [vmem:[#allocation2 + $0x8] sm:$0xff]
    %v42 = vld [vmem:[#allocation2 + $0x10] sm:$0xff]
    %v43 = vld [vmem:[#allocation2 + $0x18] sm:$0xff]
    %v44 = vld [vmem:[#allocation2 + $0x20] sm:$0xff]
    %v45 = vld [vmem:[#allocation2 + $0x28] sm:$0xff]
    %v46 = vld [vmem:[#allocation2 + $0x30] sm:$0xff]
    %v47 = vld [vmem:[#allocation2 + $0x38] sm:$0xff]
    %v48 = vld [vmem:[#allocation2 + $0x40] sm:$0xff]
    %v49 = vld [vmem:[#allocation2 + $0x48] sm:$0xff]
    %v50 = vld [vmem:[#allocation2 + $0x50] sm:$0xff]
    %v51 = vld [vmem:[#allocation2 + $0x58] sm:$0xff]
    %v52 = vld [vmem:[#allocation2 + $0x60] sm:$0xff]
    %v53 = vld [vmem:[#allocation2 + $0x68] sm:$0xff]
    %v54 = vld [vmem:[#allocation2 + $0x70] sm:$0xff]
    %v55 = vld [vmem:[#allocation2 + $0x78] sm:$0xff]
    %v56 = vld [vmem:[#allocation2 + $0x80] sm:$0xff]
    %v57 = vld [vmem:[#allocation2 + $0x88] sm:$0xff]
    %v58 = vld [vmem:[#allocation2 + $0x90] sm:$0xff]
    %v59 = vld [vmem:[#allocation2 + $0x98] sm:$0xff]
    %v60 = vld [vmem:[#allocation2 + $0xa0] sm:$0xff]
    %v61 = vld [vmem:[#allocation2 + $0xa8] sm:$0xff]
    %v62 = vld [vmem:[#allocation2 + $0xb0] sm:$0xff]
    %v63 = vld [vmem:[#allocation2 + $0xb8] sm:$0xff]
    %v64 = vld [vmem:[#allocation2 + $0xc0] sm:$0xff]
    %v65 = vld [vmem:[#allocation2 + $0xc8] sm:$0xff]
    %v66 = vld [vmem:[#allocation2 + $0xd0] sm:$0xff]
    %v67 = vld [vmem:[#allocation2 + $0xd8] sm:$0xff]
    %v68 = vld [vmem:[#allocation2 + $0xe0] sm:$0xff]
    %v69 = vld [vmem:[#allocation2 + $0xe8] sm:$0xff]
    %v70 = vld [vmem:[#allocation2 + $0xf0] sm:$0xff]
    %v71 = vld [vmem:[#allocation2 + $0xf8] sm:$0xff]
    %v72 = vld [vmem:[#allocation2 + $0x100] sm:$0xff]
    %v73 = vld [vmem:[#allocation2 + $0x108] sm:$0xff]
    %v74 = vld [vmem:[#allocation2 + $0x110] sm:$0xff]
    %v75 = vld [vmem:[#allocation2 + $0x118] sm:$0xff]
    %v76 = vld [vmem:[#allocation2 + $0x120] sm:$0xff]
    %v77 = vld [vmem:[#allocation2 + $0x128] sm:$0xff]
    %v78 = vld [vmem:[#allocation2 + $0x130] sm:$0xff]
    %v79 = vld [vmem:[#allocation2 + $0x138] sm:$0xff]
    %v80 = vld [vmem:[#allocation2 + $0x140] sm:$0xff]
    %v81 = vld [vmem:[#allocation2 + $0x148] sm:$0xff]
    %v82 = vld [vmem:[#allocation2 + $0x150] sm:$0xff]
    %v83 = vld [vmem:[#allocation2 + $0x158] sm:$0xff]
    %v84 = vld [vmem:[#allocation2 + $0x160] sm:$0xff]
    %v85 = vld [vmem:[#allocation2 + $0x168] sm:$0xff]
    %v86 = vld [vmem:[#allocation2 + $0x170] sm:$0xff]
    %v87 = vld [vmem:[#allocation2 + $0x178] sm:$0xff]
    %v88 = vld [vmem:[#allocation2 + $0x180] sm:$0xff]
    %v89 = vld [vmem:[#allocation2 + $0x188] sm:$0xff]
    %v90 = vld [vmem:[#allocation2 + $0x190] sm:$0xff]
    %v91 = vld [vmem:[#allocation2 + $0x198] sm:$0xff]
    %v92 = vld [vmem:[#allocation2 + $0x1a0] sm:$0xff]
    %v93 = vld [vmem:[#allocation2 + $0x1a8] sm:$0xff]
    %v94 = vld [vmem:[#allocation2 + $0x1b0] sm:$0xff]
    %v95 = vld [vmem:[#allocation2 + $0x1b8] sm:$0xff]
    %v96 = vld [vmem:[#allocation2 + $0x1c0] sm:$0xff]
    %v97 = vld [vmem:[#allocation2 + $0x1c8] sm:$0xff]
    %v98 = vld [vmem:[#allocation2 + $0x1d0] sm:$0xff]
    %v99 = vld [vmem:[#allocation2 + $0x1d8] sm:$0xff]
    %v100 = vld [vmem:[#allocation2 + $0x1e0] sm:$0xff]
    %v101 = vld [vmem:[#allocation2 + $0x1e8] sm:$0xff]
    %v102 = vld [vmem:[#allocation2 + $0x1f0] sm:$0xff]
    %v103 = vld [vmem:[#allocation2 + $0x1f8] sm:$0xff]
    %v104 = vld [vmem:[#allocation5] sm:$0xff]
    %v105 = vld [vmem:[#allocation5 + $0x8] sm:$0xff]
    %v106 = vld [vmem:[#allocation5 + $0x10] sm:$0xff]
    %v107 = vld [vmem:[#allocation5 + $0x18] sm:$0xff]
    %v108 = vld [vmem:[#allocation5 + $0x20] sm:$0xff]
    %v109 = vld [vmem:[#allocation5 + $0x28] sm:$0xff]
    %v110 = vld [vmem:[#allocation5 + $0x30] sm:$0xff]
    %v111 = vld [vmem:[#allocation5 + $0x38] sm:$0xff]
    %v112 = vld [vmem:[#allocation5 + $0x40] sm:$0xff]
    %v113 = vld [vmem:[#allocation5 + $0x48] sm:$0xff]
    %v114 = vld [vmem:[#allocation5 + $0x50] sm:$0xff]
    %v115 = vld [vmem:[#allocation5 + $0x58] sm:$0xff]
    %v116 = vld [vmem:[#allocation5 + $0x60] sm:$0xff]
    %v117 = vld [vmem:[#allocation5 + $0x68] sm:$0xff]
    %v118 = vld [vmem:[#allocation5 + $0x70] sm:$0xff]
    %v119 = vld [vmem:[#allocation5 + $0x78] sm:$0xff]
    %v120 = vld [vmem:[#allocation5 + $0x80] sm:$0xff]
    %v121 = vld [vmem:[#allocation5 + $0x88] sm:$0xff]
    %v122 = vld [vmem:[#allocation5 + $0x90] sm:$0xff]
    %v123 = vld [vmem:[#allocation5 + $0x98] sm:$0xff]
    %v124 = vld [vmem:[#allocation5 + $0xa0] sm:$0xff]
    %v125 = vld [vmem:[#allocation5 + $0xa8] sm:$0xff]
    %v126 = vld [vmem:[#allocation5 + $0xb0] sm:$0xff]
    %v127 = vld [vmem:[#allocation5 + $0xb8] sm:$0xff]
    %v128 = vld [vmem:[#allocation5 + $0xc0] sm:$0xff]
    %v129 = vld [vmem:[#allocation5 + $0xc8] sm:$0xff]
    %v130 = vld [vmem:[#allocation5 + $0xd0] sm:$0xff]
    %v131 = vld [vmem:[#allocation5 + $0xd8] sm:$0xff]
    %v132 = vld [vmem:[#allocation5 + $0xe0] sm:$0xff]
    %v133 = vld [vmem:[#allocation5 + $0xe8] sm:$0xff]
    %v134 = vld [vmem:[#allocation5 + $0xf0] sm:$0xff]
    %v135 = vld [vmem:[#allocation5 + $0xf8] sm:$0xff]
    %v136 = vld [vmem:[#allocation5 + $0x100] sm:$0xff]
    %v137 = vld [vmem:[#allocation5 + $0x108] sm:$0xff]
    %v138 = vld [vmem:[#allocation5 + $0x110] sm:$0xff]
    %v139 = vld [vmem:[#allocation5 + $0x118] sm:$0xff]
    %v140 = vld [vmem:[#allocation5 + $0x120] sm:$0xff]
    %v141 = vld [vmem:[#allocation5 + $0x128] sm:$0xff]
    %v142 = vld [vmem:[#allocation5 + $0x130] sm:$0xff]
    %v143 = vld [vmem:[#allocation5 + $0x138] sm:$0xff]
    %v144 = vld [vmem:[#allocation5 + $0x140] sm:$0xff]
    %v145 = vld [vmem:[#allocation5 + $0x148] sm:$0xff]
    %v146 = vld [vmem:[#allocation5 + $0x150] sm:$0xff]
    %v147 = vld [vmem:[#allocation5 + $0x158] sm:$0xff]
    %v148 = vld [vmem:[#allocation5 + $0x160] sm:$0xff]
    %v149 = vld [vmem:[#allocation5 + $0x168] sm:$0xff]
    %v150 = vld [vmem:[#allocation5 + $0x170] sm:$0xff]
    %v151 = vld [vmem:[#allocation5 + $0x178] sm:$0xff]
    %v152 = vld [vmem:[#allocation5 + $0x180] sm:$0xff]
    %v153 = vld [vmem:[#allocation5 + $0x188] sm:$0xff]
    %v154 = vld [vmem:[#allocation5 + $0x190] sm:$0xff]
    %v155 = vld [vmem:[#allocation5 + $0x198] sm:$0xff]
    %v156 = vld [vmem:[#allocation5 + $0x1a0] sm:$0xff]
    %v157 = vld [vmem:[#allocation5 + $0x1a8] sm:$0xff]
    %v158 = vld [vmem:[#allocation5 + $0x1b0] sm:$0xff]
    %v159 = vld [vmem:[#allocation5 + $0x1b8] sm:$0xff]
    %v160 = vld [vmem:[#allocation5 + $0x1c0] sm:$0xff]
    %v161 = vld [vmem:[#allocation5 + $0x1c8] sm:$0xff]
    %v162 = vld [vmem:[#allocation5 + $0x1d0] sm:$0xff]
    %v163 = vld [vmem:[#allocation5 + $0x1d8] sm:$0xff]
    %v164 = vld [vmem:[#allocation5 + $0x1e0] sm:$0xff]
    %v165 = vld [vmem:[#allocation5 + $0x1e8] sm:$0xff]
    %v166 = vld [vmem:[#allocation5 + $0x1f0] sm:$0xff]
    %v167 = vld [vmem:[#allocation5 + $0x1f8] sm:$0xff]
    %v232 = vunpack.c.l.b16 %v40
    %v233 = vunpack.c.h.b16 %v40
    %v234 = vunpack.c.l.b16 %v41
    %v235 = vunpack.c.h.b16 %v41
    %v236 = vunpack.c.l.b16 %v42
    %v237 = vunpack.c.h.b16 %v42
    %v238 = vunpack.c.l.b16 %v43
    %v239 = vunpack.c.h.b16 %v43
    %v240 = vunpack.c.l.b16 %v44
    %v241 = vunpack.c.h.b16 %v44
    %v242 = vunpack.c.l.b16 %v45
    %v243 = vunpack.c.h.b16 %v45
    %v244 = vunpack.c.l.b16 %v46
    %v245 = vunpack.c.h.b16 %v46
    %v246 = vunpack.c.l.b16 %v47
    %v247 = vunpack.c.h.b16 %v47
    %v248 = vunpack.c.l.b16 %v48
    %v249 = vunpack.c.h.b16 %v48
    %v250 = vunpack.c.l.b16 %v49
    %v251 = vunpack.c.h.b16 %v49
    %v252 = vunpack.c.l.b16 %v50
    %v253 = vunpack.c.h.b16 %v50
    %v254 = vunpack.c.l.b16 %v51
    %v255 = vunpack.c.h.b16 %v51
    %v256 = vunpack.c.l.b16 %v52
    %v257 = vunpack.c.h.b16 %v52
    %v258 = vunpack.c.l.b16 %v53
    %v259 = vunpack.c.h.b16 %v53
    %v260 = vunpack.c.l.b16 %v54
    %v261 = vunpack.c.h.b16 %v54
    %v262 = vunpack.c.l.b16 %v55
    %v263 = vunpack.c.h.b16 %v55
    %v264 = vunpack.c.l.b16 %v56
    %v265 = vunpack.c.h.b16 %v56
    %v266 = vunpack.c.l.b16 %v57
    %v267 = vunpack.c.h.b16 %v57
    %v268 = vunpack.c.l.b16 %v58
    %v269 = vunpack.c.h.b16 %v58
    %v270 = vunpack.c.l.b16 %v59
    %v271 = vunpack.c.h.b16 %v59
    %v272 = vunpack.c.l.b16 %v60
    %v273 = vunpack.c.h.b16 %v60
    %v274 = vunpack.c.l.b16 %v61
    %v275 = vunpack.c.h.b16 %v61
    %v276 = vunpack.c.l.b16 %v62
    %v277 = vunpack.c.h.b16 %v62
    %v278 = vunpack.c.l.b16 %v63
    %v279 = vunpack.c.h.b16 %v63
    %v280 = vunpack.c.l.b16 %v64
    %v281 = vunpack.c.h.b16 %v64
    %v282 = vunpack.c.l.b16 %v65
    %v283 = vunpack.c.h.b16 %v65
    %v284 = vunpack.c.l.b16 %v66
    %v285 = vunpack.c.h.b16 %v66
    %v286 = vunpack.c.l.b16 %v67
    %v287 = vunpack.c.h.b16 %v67
    %v288 = vunpack.c.l.b16 %v68
    %v289 = vunpack.c.h.b16 %v68
    %v290 = vunpack.c.l.b16 %v69
    %v291 = vunpack.c.h.b16 %v69
    %v292 = vunpack.c.l.b16 %v70
    %v293 = vunpack.c.h.b16 %v70
    %v294 = vunpack.c.l.b16 %v71
    %v295 = vunpack.c.h.b16 %v71
    %v296 = vunpack.c.l.b16 %v72
    %v297 = vunpack.c.h.b16 %v72
    %v298 = vunpack.c.l.b16 %v73
    %v299 = vunpack.c.h.b16 %v73
    %v300 = vunpack.c.l.b16 %v74
    %v301 = vunpack.c.h.b16 %v74
    %v302 = vunpack.c.l.b16 %v75
    %v303 = vunpack.c.h.b16 %v75
    %v304 = vunpack.c.l.b16 %v76
    %v305 = vunpack.c.h.b16 %v76
    %v306 = vunpack.c.l.b16 %v77
    %v307 = vunpack.c.h.b16 %v77
    %v308 = vunpack.c.l.b16 %v78
    %v309 = vunpack.c.h.b16 %v78
    %v310 = vunpack.c.l.b16 %v79
    %v311 = vunpack.c.h.b16 %v79
    %v312 = vunpack.c.l.b16 %v80
    %v313 = vunpack.c.h.b16 %v80
    %v314 = vunpack.c.l.b16 %v81
    %v315 = vunpack.c.h.b16 %v81
    %v316 = vunpack.c.l.b16 %v82
    %v317 = vunpack.c.h.b16 %v82
    %v318 = vunpack.c.l.b16 %v83
    %v319 = vunpack.c.h.b16 %v83
    %v320 = vunpack.c.l.b16 %v84
    %v321 = vunpack.c.h.b16 %v84
    %v322 = vunpack.c.l.b16 %v85
    %v323 = vunpack.c.h.b16 %v85
    %v324 = vunpack.c.l.b16 %v86
    %v325 = vunpack.c.h.b16 %v86
    %v326 = vunpack.c.l.b16 %v87
    %v327 = vunpack.c.h.b16 %v87
    %v328 = vunpack.c.l.b16 %v88
    %v329 = vunpack.c.h.b16 %v88
    %v330 = vunpack.c.l.b16 %v89
    %v331 = vunpack.c.h.b16 %v89
    %v332 = vunpack.c.l.b16 %v90
    %v333 = vunpack.c.h.b16 %v90
    %v334 = vunpack.c.l.b16 %v91
    %v335 = vunpack.c.h.b16 %v91
    %v336 = vunpack.c.l.b16 %v92
    %v337 = vunpack.c.h.b16 %v92
    %v338 = vunpack.c.l.b16 %v93
    %v339 = vunpack.c.h.b16 %v93
    %v340 = vunpack.c.l.b16 %v94
    %v341 = vunpack.c.h.b16 %v94
    %v342 = vunpack.c.l.b16 %v95
    %v343 = vunpack.c.h.b16 %v95
    %v344 = vunpack.c.l.b16 %v96
    %v345 = vunpack.c.h.b16 %v96
    %v346 = vunpack.c.l.b16 %v97
    %v347 = vunpack.c.h.b16 %v97
    %v348 = vunpack.c.l.b16 %v98
    %v349 = vunpack.c.h.b16 %v98
    %v350 = vunpack.c.l.b16 %v99
    %v351 = vunpack.c.h.b16 %v99
    %v352 = vunpack.c.l.b16 %v100
    %v353 = vunpack.c.h.b16 %v100
    %v354 = vunpack.c.l.b16 %v101
    %v355 = vunpack.c.h.b16 %v101
    %v356 = vunpack.c.l.b16 %v102
    %v357 = vunpack.c.h.b16 %v102
    %v358 = vunpack.c.l.b16 %v103
    %v359 = vunpack.c.h.b16 %v103
    %v360 = vpack.c.b16 %v236, %v232
    %v361 = vpack.c.b16 %v237, %v233
    %v362 = vpack.c.b16 %v238, %v234
    %v363 = vpack.c.b16 %v239, %v235
    %v364 = vpack.c.b16 %v244, %v240
    %v365 = vpack.c.b16 %v245, %v241
    %v366 = vpack.c.b16 %v246, %v242
    %v367 = vpack.c.b16 %v247, %v243
    %v368 = vpack.c.b16 %v252, %v248
    %v369 = vpack.c.b16 %v253, %v249
    %v370 = vpack.c.b16 %v254, %v250
    %v371 = vpack.c.b16 %v255, %v251
    %v372 = vpack.c.b16 %v260, %v256
    %v373 = vpack.c.b16 %v261, %v257
    %v374 = vpack.c.b16 %v262, %v258
    %v375 = vpack.c.b16 %v263, %v259
    %v376 = vpack.c.b16 %v268, %v264
    %v377 = vpack.c.b16 %v269, %v265
    %v378 = vpack.c.b16 %v270, %v266
    %v379 = vpack.c.b16 %v271, %v267
    %v380 = vpack.c.b16 %v276, %v272
    %v381 = vpack.c.b16 %v277, %v273
    %v382 = vpack.c.b16 %v278, %v274
    %v383 = vpack.c.b16 %v279, %v275
    %v384 = vpack.c.b16 %v284, %v280
    %v385 = vpack.c.b16 %v285, %v281
    %v386 = vpack.c.b16 %v286, %v282
    %v387 = vpack.c.b16 %v287, %v283
    %v388 = vpack.c.b16 %v292, %v288
    %v389 = vpack.c.b16 %v293, %v289
    %v390 = vpack.c.b16 %v294, %v290
    %v391 = vpack.c.b16 %v295, %v291
    %v392 = vpack.c.b16 %v300, %v296
    %v393 = vpack.c.b16 %v301, %v297
    %v394 = vpack.c.b16 %v302, %v298
    %v395 = vpack.c.b16 %v303, %v299
    %v396 = vpack.c.b16 %v308, %v304
    %v397 = vpack.c.b16 %v309, %v305
    %v398 = vpack.c.b16 %v310, %v306
    %v399 = vpack.c.b16 %v311, %v307
    %v400 = vpack.c.b16 %v316, %v312
    %v401 = vpack.c.b16 %v317, %v313
    %v402 = vpack.c.b16 %v318, %v314
    %v403 = vpack.c.b16 %v319, %v315
    %v404 = vpack.c.b16 %v324, %v320
    %v405 = vpack.c.b16 %v325, %v321
    %v406 = vpack.c.b16 %v326, %v322
    %v407 = vpack.c.b16 %v327, %v323
    %v408 = vpack.c.b16 %v332, %v328
    %v409 = vpack.c.b16 %v333, %v329
    %v410 = vpack.c.b16 %v334, %v330
    %v411 = vpack.c.b16 %v335, %v331
    %v412 = vpack.c.b16 %v340, %v336
    %v413 = vpack.c.b16 %v341, %v337
    %v414 = vpack.c.b16 %v342, %v338
    %v415 = vpack.c.b16 %v343, %v339
    %v416 = vpack.c.b16 %v348, %v344
    %v417 = vpack.c.b16 %v349, %v345
    %v418 = vpack.c.b16 %v350, %v346
    %v419 = vpack.c.b16 %v351, %v347
    %v420 = vpack.c.b16 %v356, %v352
    %v421 = vpack.c.b16 %v357, %v353
    %v422 = vpack.c.b16 %v358, %v354
    %v423 = vpack.c.b16 %v359, %v355
    %v552 = vunpack.c.l.b16 %v104
    %v553 = vunpack.c.h.b16 %v104
    %v554 = vunpack.c.l.b16 %v105
    %v555 = vunpack.c.h.b16 %v105
    %v556 = vunpack.c.l.b16 %v106
    %v557 = vunpack.c.h.b16 %v106
    %v558 = vunpack.c.l.b16 %v107
    %v559 = vunpack.c.h.b16 %v107
    %v560 = vunpack.c.l.b16 %v108
    %v561 = vunpack.c.h.b16 %v108
    %v562 = vunpack.c.l.b16 %v109
    %v563 = vunpack.c.h.b16 %v109
    %v564 = vunpack.c.l.b16 %v110
    %v565 = vunpack.c.h.b16 %v110
    %v566 = vunpack.c.l.b16 %v111
    %v567 = vunpack.c.h.b16 %v111
    %v568 = vunpack.c.l.b16 %v112
    %v569 = vunpack.c.h.b16 %v112
    %v570 = vunpack.c.l.b16 %v113
    %v571 = vunpack.c.h.b16 %v113
    %v572 = vunpack.c.l.b16 %v114
    %v573 = vunpack.c.h.b16 %v114
    %v574 = vunpack.c.l.b16 %v115
    %v575 = vunpack.c.h.b16 %v115
    %v576 = vunpack.c.l.b16 %v116
    %v577 = vunpack.c.h.b16 %v116
    %v578 = vunpack.c.l.b16 %v117
    %v579 = vunpack.c.h.b16 %v117
    %v580 = vunpack.c.l.b16 %v118
    %v581 = vunpack.c.h.b16 %v118
    %v582 = vunpack.c.l.b16 %v119
    %v583 = vunpack.c.h.b16 %v119
    %v584 = vunpack.c.l.b16 %v120
    %v585 = vunpack.c.h.b16 %v120
    %v586 = vunpack.c.l.b16 %v121
    %v587 = vunpack.c.h.b16 %v121
    %v588 = vunpack.c.l.b16 %v122
    %v589 = vunpack.c.h.b16 %v122
    %v590 = vunpack.c.l.b16 %v123
    %v591 = vunpack.c.h.b16 %v123
    %v592 = vunpack.c.l.b16 %v124
    %v593 = vunpack.c.h.b16 %v124
    %v594 = vunpack.c.l.b16 %v125
    %v595 = vunpack.c.h.b16 %v125
    %v596 = vunpack.c.l.b16 %v126
    %v597 = vunpack.c.h.b16 %v126
    %v598 = vunpack.c.l.b16 %v127
    %v599 = vunpack.c.h.b16 %v127
    %v600 = vunpack.c.l.b16 %v128
    %v601 = vunpack.c.h.b16 %v128
    %v602 = vunpack.c.l.b16 %v129
    %v603 = vunpack.c.h.b16 %v129
    %v604 = vunpack.c.l.b16 %v130
    %v605 = vunpack.c.h.b16 %v130
    %v606 = vunpack.c.l.b16 %v131
    %v607 = vunpack.c.h.b16 %v131
    %v608 = vunpack.c.l.b16 %v132
    %v609 = vunpack.c.h.b16 %v132
    %v610 = vunpack.c.l.b16 %v133
    %v611 = vunpack.c.h.b16 %v133
    %v612 = vunpack.c.l.b16 %v134
    %v613 = vunpack.c.h.b16 %v134
    %v614 = vunpack.c.l.b16 %v135
    %v615 = vunpack.c.h.b16 %v135
    %v616 = vunpack.c.l.b16 %v136
    %v617 = vunpack.c.h.b16 %v136
    %v618 = vunpack.c.l.b16 %v137
    %v619 = vunpack.c.h.b16 %v137
    %v620 = vunpack.c.l.b16 %v138
    %v621 = vunpack.c.h.b16 %v138
    %v622 = vunpack.c.l.b16 %v139
    %v623 = vunpack.c.h.b16 %v139
    %v624 = vunpack.c.l.b16 %v140
    %v625 = vunpack.c.h.b16 %v140
    %v626 = vunpack.c.l.b16 %v141
    %v627 = vunpack.c.h.b16 %v141
    %v628 = vunpack.c.l.b16 %v142
    %v629 = vunpack.c.h.b16 %v142
    %v630 = vunpack.c.l.b16 %v143
    %v631 = vunpack.c.h.b16 %v143
    %v632 = vunpack.c.l.b16 %v144
    %v633 = vunpack.c.h.b16 %v144
    %v634 = vunpack.c.l.b16 %v145
    %v635 = vunpack.c.h.b16 %v145
    %v636 = vunpack.c.l.b16 %v146
    %v637 = vunpack.c.h.b16 %v146
    %v638 = vunpack.c.l.b16 %v147
    %v639 = vunpack.c.h.b16 %v147
    %v640 = vunpack.c.l.b16 %v148
    %v641 = vunpack.c.h.b16 %v148
    %v642 = vunpack.c.l.b16 %v149
    %v643 = vunpack.c.h.b16 %v149
    %v644 = vunpack.c.l.b16 %v150
    %v645 = vunpack.c.h.b16 %v150
    %v646 = vunpack.c.l.b16 %v151
    %v647 = vunpack.c.h.b16 %v151
    %v648 = vunpack.c.l.b16 %v152
    %v649 = vunpack.c.h.b16 %v152
    %v650 = vunpack.c.l.b16 %v153
    %v651 = vunpack.c.h.b16 %v153
    %v652 = vunpack.c.l.b16 %v154
    %v653 = vunpack.c.h.b16 %v154
    %v654 = vunpack.c.l.b16 %v155
    %v655 = vunpack.c.h.b16 %v155
    %v656 = vunpack.c.l.b16 %v156
    %v657 = vunpack.c.h.b16 %v156
    %v658 = vunpack.c.l.b16 %v157
    %v659 = vunpack.c.h.b16 %v157
    %v660 = vunpack.c.l.b16 %v158
    %v661 = vunpack.c.h.b16 %v158
    %v662 = vunpack.c.l.b16 %v159
    %v663 = vunpack.c.h.b16 %v159
    %v664 = vunpack.c.l.b16 %v160
    %v665 = vunpack.c.h.b16 %v160
    %v666 = vunpack.c.l.b16 %v161
    %v667 = vunpack.c.h.b16 %v161
    %v668 = vunpack.c.l.b16 %v162
    %v669 = vunpack.c.h.b16 %v162
    %v670 = vunpack.c.l.b16 %v163
    %v671 = vunpack.c.h.b16 %v163
    %v672 = vunpack.c.l.b16 %v164
    %v673 = vunpack.c.h.b16 %v164
    %v674 = vunpack.c.l.b16 %v165
    %v675 = vunpack.c.h.b16 %v165
    %v676 = vunpack.c.l.b16 %v166
    %v677 = vunpack.c.h.b16 %v166
    %v678 = vunpack.c.l.b16 %v167
    %v679 = vunpack.c.h.b16 %v167
    %v680 = vpack.c.b16 %v554, %v552
    %v681 = vpack.c.b16 %v555, %v553
    %v682 = vpack.c.b16 %v558, %v556
    %v683 = vpack.c.b16 %v559, %v557
    %v684 = vpack.c.b16 %v562, %v560
    %v685 = vpack.c.b16 %v563, %v561
    %v686 = vpack.c.b16 %v566, %v564
    %v687 = vpack.c.b16 %v567, %v565
    %v688 = vpack.c.b16 %v570, %v568
    %v689 = vpack.c.b16 %v571, %v569
    %v690 = vpack.c.b16 %v574, %v572
    %v691 = vpack.c.b16 %v575, %v573
    %v692 = vpack.c.b16 %v578, %v576
    %v693 = vpack.c.b16 %v579, %v577
    %v694 = vpack.c.b16 %v582, %v580
    %v695 = vpack.c.b16 %v583, %v581
    %v696 = vpack.c.b16 %v586, %v584
    %v697 = vpack.c.b16 %v587, %v585
    %v698 = vpack.c.b16 %v590, %v588
    %v699 = vpack.c.b16 %v591, %v589
    %v700 = vpack.c.b16 %v594, %v592
    %v701 = vpack.c.b16 %v595, %v593
    %v702 = vpack.c.b16 %v598, %v596
    %v703 = vpack.c.b16 %v599, %v597
    %v704 = vpack.c.b16 %v602, %v600
    %v705 = vpack.c.b16 %v603, %v601
    %v706 = vpack.c.b16 %v606, %v604
    %v707 = vpack.c.b16 %v607, %v605
    %v708 = vpack.c.b16 %v610, %v608
    %v709 = vpack.c.b16 %v611, %v609
    %v710 = vpack.c.b16 %v614, %v612
    %v711 = vpack.c.b16 %v615, %v613
    %v712 = vpack.c.b16 %v618, %v616
    %v713 = vpack.c.b16 %v619, %v617
    %v714 = vpack.c.b16 %v622, %v620
    %v715 = vpack.c.b16 %v623, %v621
    %v716 = vpack.c.b16 %v626, %v624
    %v717 = vpack.c.b16 %v627, %v625
    %v718 = vpack.c.b16 %v630, %v628
    %v719 = vpack.c.b16 %v631, %v629
    %v720 = vpack.c.b16 %v634, %v632
    %v721 = vpack.c.b16 %v635, %v633
    %v722 = vpack.c.b16 %v638, %v636
    %v723 = vpack.c.b16 %v639, %v637
    %v724 = vpack.c.b16 %v642, %v640
    %v725 = vpack.c.b16 %v643, %v641
    %v726 = vpack.c.b16 %v646, %v644
    %v727 = vpack.c.b16 %v647, %v645
    %v728 = vpack.c.b16 %v650, %v648
    %v729 = vpack.c.b16 %v651, %v649
    %v730 = vpack.c.b16 %v654, %v652
    %v731 = vpack.c.b16 %v655, %v653
    %v732 = vpack.c.b16 %v658, %v656
    %v733 = vpack.c.b16 %v659, %v657
    %v734 = vpack.c.b16 %v662, %v660
    %v735 = vpack.c.b16 %v663, %v661
    %v736 = vpack.c.b16 %v666, %v664
    %v737 = vpack.c.b16 %v667, %v665
    %v738 = vpack.c.b16 %v670, %v668
    %v739 = vpack.c.b16 %v671, %v669
    %v740 = vpack.c.b16 %v674, %v672
    %v741 = vpack.c.b16 %v675, %v673
    %v742 = vpack.c.b16 %v678, %v676
    %v743 = vpack.c.b16 %v679, %v677
    %808 = vmatprep.subr.bf16.mxu0 %v695
    %809 = vmatpush1.bf16.msra.mxu0 %v694
    %810 = vmatprep.subr.bf16.mxu0 %v693
    %811 = vmatpush1.bf16.msra.mxu0 %v692
    %812 = vmatprep.subr.bf16.mxu0 %v691
    %813 = vmatpush1.bf16.msra.mxu0 %v690
    %814 = vmatprep.subr.bf16.mxu0 %v689
    %815 = vmatpush1.bf16.msra.mxu0 %v688
    %816 = vmatprep.subr.bf16.mxu0 %v687
    %817 = vmatpush1.bf16.msra.mxu0 %v686
    %818 = vmatprep.subr.bf16.mxu0 %v685
    %819 = vmatpush1.bf16.msra.mxu0 %v684
    %820 = vmatprep.subr.bf16.mxu0 %v683
    %821 = vmatpush1.bf16.msra.mxu0 %v682
    %822 = vmatprep.subr.bf16.mxu0 %v681
    %823 = vmatpush1.bf16.msra.mxu0 %v680
    %824 = vmatprep.subr.bf16.mxu0 %v711
    %825 = vmatpush2.bf16.msra.mxu0 %v710
    %826 = vmatprep.subr.bf16.mxu0 %v709
    %827 = vmatpush2.bf16.msra.mxu0 %v708
    %828 = vmatprep.subr.bf16.mxu0 %v707
    %829 = vmatpush2.bf16.msra.mxu0 %v706
    %830 = vmatprep.subr.bf16.mxu0 %v705
    %831 = vmatpush2.bf16.msra.mxu0 %v704
    %832 = vmatprep.subr.bf16.mxu0 %v703
    %833 = vmatpush2.bf16.msra.mxu0 %v702
    %834 = vmatprep.subr.bf16.mxu0 %v701
    %835 = vmatpush2.bf16.msra.mxu0 %v700
    %836 = vmatprep.subr.bf16.mxu0 %v699
    %837 = vmatpush2.bf16.msra.mxu0 %v698
    %838 = vmatprep.subr.bf16.mxu0 %v697
    %839 = vmatpush2.bf16.msra.mxu0 %v696
    %840 = vmatprep.mubr.bf16.mxu0 %v361
    %841 = vmatmul.mubr.bf16.gmra.mxu0 %v360
    %v842 = vpop.f32.mrf.mxu0
    %v843 = vadd.f32 0.0, %v842
    %v844 = vpop.f32.mrf.mxu0
    %v845 = vadd.f32 0.0, %v844
    %v846 = vpop.f32.mrf.mxu0
    %v847 = vadd.f32 0.0, %v846
    %v848 = vpop.f32.mrf.mxu0
    %v849 = vadd.f32 0.0, %v848
    %850 = vmatprep.mubr.bf16.mxu0 %v365
    %851 = vmatmul.mubr.bf16.gmra.mxu0 %v364
    %v852 = vpop.f32.mrf.mxu0
    %v853 = vadd.f32 0.0, %v852
    %v854 = vpop.f32.mrf.mxu0
    %v855 = vadd.f32 0.0, %v854
    %v856 = vpop.f32.mrf.mxu0
    %v857 = vadd.f32 0.0, %v856
    %v858 = vpop.f32.mrf.mxu0
    %v859 = vadd.f32 0.0, %v858
    %860 = vmatprep.mubr.bf16.mxu0 %v369
    %861 = vmatmul.mubr.bf16.gmra.mxu0 %v368
    %v862 = vpop.f32.mrf.mxu0
    %v863 = vadd.f32 0.0, %v862
    %v864 = vpop.f32.mrf.mxu0
    %v865 = vadd.f32 0.0, %v864
    %v866 = vpop.f32.mrf.mxu0
    %v867 = vadd.f32 0.0, %v866
    %v868 = vpop.f32.mrf.mxu0
    %v869 = vadd.f32 0.0, %v868
    %870 = vmatprep.mubr.bf16.mxu0 %v373
    %871 = vmatmul.mubr.bf16.gmra.mxu0 %v372
    %v872 = vpop.f32.mrf.mxu0
    %v873 = vadd.f32 0.0, %v872
    %v874 = vpop.f32.mrf.mxu0
    %v875 = vadd.f32 0.0, %v874
    %v876 = vpop.f32.mrf.mxu0
    %v877 = vadd.f32 0.0, %v876
    %v878 = vpop.f32.mrf.mxu0
    %v879 = vadd.f32 0.0, %v878
    %880 = vmatprep.mubr.bf16.mxu0 %v377
    %881 = vmatmul.mubr.bf16.gmra.mxu0 %v376
    %v882 = vpop.f32.mrf.mxu0
    %v883 = vadd.f32 0.0, %v882
    %v884 = vpop.f32.mrf.mxu0
    %v885 = vadd.f32 0.0, %v884
    %v886 = vpop.f32.mrf.mxu0
    %v887 = vadd.f32 0.0, %v886
    %v888 = vpop.f32.mrf.mxu0
    %v889 = vadd.f32 0.0, %v888
    %890 = vmatprep.mubr.bf16.mxu0 %v381
    %891 = vmatmul.mubr.bf16.gmra.mxu0 %v380
    %v892 = vpop.f32.mrf.mxu0
    %v893 = vadd.f32 0.0, %v892
    %v894 = vpop.f32.mrf.mxu0
    %v895 = vadd.f32 0.0, %v894
    %v896 = vpop.f32.mrf.mxu0
    %v897 = vadd.f32 0.0, %v896
    %v898 = vpop.f32.mrf.mxu0
    %v899 = vadd.f32 0.0, %v898
    %900 = vmatprep.mubr.bf16.mxu0 %v385
    %901 = vmatmul.mubr.bf16.gmra.mxu0 %v384
    %v902 = vpop.f32.mrf.mxu0
    %v903 = vadd.f32 0.0, %v902
    %v904 = vpop.f32.mrf.mxu0
    %v905 = vadd.f32 0.0, %v904
    %v906 = vpop.f32.mrf.mxu0
    %v907 = vadd.f32 0.0, %v906
    %v908 = vpop.f32.mrf.mxu0
    %v909 = vadd.f32 0.0, %v908
    %910 = vmatprep.mubr.bf16.mxu0 %v389
    %911 = vmatmul.mubr.bf16.gmra.mxu0 %v388
    %v912 = vpop.f32.mrf.mxu0
    %v913 = vadd.f32 0.0, %v912
    %v914 = vpop.f32.mrf.mxu0
    %v915 = vadd.f32 0.0, %v914
    %v916 = vpop.f32.mrf.mxu0
    %v917 = vadd.f32 0.0, %v916
    %v918 = vpop.f32.mrf.mxu0
    %v919 = vadd.f32 0.0, %v918
    %920 = vmatprep.mubr.bf16.mxu0 %v393
    %921 = vmatmul.mubr.bf16.gmra.mxu0 %v392
    %v922 = vpop.f32.mrf.mxu0
    %v923 = vadd.f32 0.0, %v922
    %v924 = vpop.f32.mrf.mxu0
    %v925 = vadd.f32 0.0, %v924
    %v926 = vpop.f32.mrf.mxu0
    %v927 = vadd.f32 0.0, %v926
    %v928 = vpop.f32.mrf.mxu0
    %v929 = vadd.f32 0.0, %v928
    %930 = vmatprep.mubr.bf16.mxu0 %v397
    %931 = vmatmul.mubr.bf16.gmra.mxu0 %v396
    %v932 = vpop.f32.mrf.mxu0
    %v933 = vadd.f32 0.0, %v932
    %v934 = vpop.f32.mrf.mxu0
    %v935 = vadd.f32 0.0, %v934
    %v936 = vpop.f32.mrf.mxu0
    %v937 = vadd.f32 0.0, %v936
    %v938 = vpop.f32.mrf.mxu0
    %v939 = vadd.f32 0.0, %v938
    %940 = vmatprep.mubr.bf16.mxu0 %v401
    %941 = vmatmul.mubr.bf16.gmra.mxu0 %v400
    %v942 = vpop.f32.mrf.mxu0
    %v943 = vadd.f32 0.0, %v942
    %v944 = vpop.f32.mrf.mxu0
    %v945 = vadd.f32 0.0, %v944
    %v946 = vpop.f32.mrf.mxu0
    %v947 = vadd.f32 0.0, %v946
    %v948 = vpop.f32.mrf.mxu0
    %v949 = vadd.f32 0.0, %v948
    %950 = vmatprep.mubr.bf16.mxu0 %v405
    %951 = vmatmul.mubr.bf16.gmra.mxu0 %v404
    %v952 = vpop.f32.mrf.mxu0
    %v953 = vadd.f32 0.0, %v952
    %v954 = vpop.f32.mrf.mxu0
    %v955 = vadd.f32 0.0, %v954
    %v956 = vpop.f32.mrf.mxu0
    %v957 = vadd.f32 0.0, %v956
    %v958 = vpop.f32.mrf.mxu0
    %v959 = vadd.f32 0.0, %v958
    %960 = vmatprep.mubr.bf16.mxu0 %v409
    %961 = vmatmul.mubr.bf16.gmra.mxu0 %v408
    %v962 = vpop.f32.mrf.mxu0
    %v963 = vadd.f32 0.0, %v962
    %v964 = vpop.f32.mrf.mxu0
    %v965 = vadd.f32 0.0, %v964
    %v966 = vpop.f32.mrf.mxu0
    %v967 = vadd.f32 0.0, %v966
    %v968 = vpop.f32.mrf.mxu0
    %v969 = vadd.f32 0.0, %v968
    %970 = vmatprep.mubr.bf16.mxu0 %v413
    %971 = vmatmul.mubr.bf16.gmra.mxu0 %v412
    %v972 = vpop.f32.mrf.mxu0
    %v973 = vadd.f32 0.0, %v972
    %v974 = vpop.f32.mrf.mxu0
    %v975 = vadd.f32 0.0, %v974
    %v976 = vpop.f32.mrf.mxu0
    %v977 = vadd.f32 0.0, %v976
    %v978 = vpop.f32.mrf.mxu0
    %v979 = vadd.f32 0.0, %v978
    %980 = vmatprep.mubr.bf16.mxu0 %v417
    %981 = vmatmul.mubr.bf16.gmra.mxu0 %v416
    %v982 = vpop.f32.mrf.mxu0
    %v983 = vadd.f32 0.0, %v982
    %v984 = vpop.f32.mrf.mxu0
    %v985 = vadd.f32 0.0, %v984
    %v986 = vpop.f32.mrf.mxu0
    %v987 = vadd.f32 0.0, %v986
    %v988 = vpop.f32.mrf.mxu0
    %v989 = vadd.f32 0.0, %v988
    %990 = vmatprep.mubr.bf16.mxu0 %v421
    %991 = vmatmul.mubr.bf16.gmra.mxu0 %v420
    %v992 = vpop.f32.mrf.mxu0
    %v993 = vadd.f32 0.0, %v992
    %v994 = vpop.f32.mrf.mxu0
    %v995 = vadd.f32 0.0, %v994
    %v996 = vpop.f32.mrf.mxu0
    %v997 = vadd.f32 0.0, %v996
    %v998 = vpop.f32.mrf.mxu0
    %v999 = vadd.f32 0.0, %v998
    %1000 = vdwg.mxu0
    %1001 = vmatprep.subr.bf16.mxu0 %v727
    %1002 = vmatpush1.bf16.msra.mxu0 %v726
    %1003 = vmatprep.subr.bf16.mxu0 %v725
    %1004 = vmatpush1.bf16.msra.mxu0 %v724
    %1005 = vmatprep.subr.bf16.mxu0 %v723
    %1006 = vmatpush1.bf16.msra.mxu0 %v722
    %1007 = vmatprep.subr.bf16.mxu0 %v721
    %1008 = vmatpush1.bf16.msra.mxu0 %v720
    %1009 = vmatprep.subr.bf16.mxu0 %v719
    %1010 = vmatpush1.bf16.msra.mxu0 %v718
    %1011 = vmatprep.subr.bf16.mxu0 %v717
    %1012 = vmatpush1.bf16.msra.mxu0 %v716
    %1013 = vmatprep.subr.bf16.mxu0 %v715
    %1014 = vmatpush1.bf16.msra.mxu0 %v714
    %1015 = vmatprep.subr.bf16.mxu0 %v713
    %1016 = vmatpush1.bf16.msra.mxu0 %v712
    %1017 = vmatprep.subr.bf16.mxu0 %v743
    %1018 = vmatpush2.bf16.msra.mxu0 %v742
    %1019 = vmatprep.subr.bf16.mxu0 %v741
    %1020 = vmatpush2.bf16.msra.mxu0 %v740
    %1021 = vmatprep.subr.bf16.mxu0 %v739
    %1022 = vmatpush2.bf16.msra.mxu0 %v738
    %1023 = vmatprep.subr.bf16.mxu0 %v737
    %1024 = vmatpush2.bf16.msra.mxu0 %v736
    %1025 = vmatprep.subr.bf16.mxu0 %v735
    %1026 = vmatpush2.bf16.msra.mxu0 %v734
    %1027 = vmatprep.subr.bf16.mxu0 %v733
    %1028 = vmatpush2.bf16.msra.mxu0 %v732
    %1029 = vmatprep.subr.bf16.mxu0 %v731
    %1030 = vmatpush2.bf16.msra.mxu0 %v730
    %1031 = vmatprep.subr.bf16.mxu0 %v729
    %1032 = vmatpush2.bf16.msra.mxu0 %v728
    %1033 = vmatprep.mubr.bf16.mxu0 %v363
    %1034 = vmatmul.mubr.bf16.gmra.mxu0 %v362
    %v1035 = vpop.f32.mrf.mxu0
    %v1036 = vadd.f32 %v843, %v1035
    %v1037 = vpop.f32.mrf.mxu0
    %v1038 = vadd.f32 %v845, %v1037
    %v1039 = vpop.f32.mrf.mxu0
    %v1040 = vadd.f32 %v847, %v1039
    %v1041 = vpop.f32.mrf.mxu0
    %v1042 = vadd.f32 %v849, %v1041
    %1043 = vmatprep.mubr.bf16.mxu0 %v367
    %1044 = vmatmul.mubr.bf16.gmra.mxu0 %v366
    %v1045 = vpop.f32.mrf.mxu0
    %v1046 = vadd.f32 %v853, %v1045
    %v1047 = vpop.f32.mrf.mxu0
    %v1048 = vadd.f32 %v855, %v1047
    %v1049 = vpop.f32.mrf.mxu0
    %v1050 = vadd.f32 %v857, %v1049
    %v1051 = vpop.f32.mrf.mxu0
    %v1052 = vadd.f32 %v859, %v1051
    %1053 = vmatprep.mubr.bf16.mxu0 %v371
    %1054 = vmatmul.mubr.bf16.gmra.mxu0 %v370
    %v1055 = vpop.f32.mrf.mxu0
    %v1056 = vadd.f32 %v863, %v1055
    %v1057 = vpop.f32.mrf.mxu0
    %v1058 = vadd.f32 %v865, %v1057
    %v1059 = vpop.f32.mrf.mxu0
    %v1060 = vadd.f32 %v867, %v1059
    %v1061 = vpop.f32.mrf.mxu0
    %v1062 = vadd.f32 %v869, %v1061
    %1063 = vmatprep.mubr.bf16.mxu0 %v375
    %1064 = vmatmul.mubr.bf16.gmra.mxu0 %v374
    %v1065 = vpop.f32.mrf.mxu0
    %v1066 = vadd.f32 %v873, %v1065
    %v1067 = vpop.f32.mrf.mxu0
    %v1068 = vadd.f32 %v875, %v1067
    %v1069 = vpop.f32.mrf.mxu0
    %v1070 = vadd.f32 %v877, %v1069
    %v1071 = vpop.f32.mrf.mxu0
    %v1072 = vadd.f32 %v879, %v1071
    %1073 = vmatprep.mubr.bf16.mxu0 %v379
    %1074 = vmatmul.mubr.bf16.gmra.mxu0 %v378
    %v1075 = vpop.f32.mrf.mxu0
    %v1076 = vadd.f32 %v883, %v1075
    %v1077 = vpop.f32.mrf.mxu0
    %v1078 = vadd.f32 %v885, %v1077
    %v1079 = vpop.f32.mrf.mxu0
    %v1080 = vadd.f32 %v887, %v1079
    %v1081 = vpop.f32.mrf.mxu0
    %v1082 = vadd.f32 %v889, %v1081
    %1083 = vmatprep.mubr.bf16.mxu0 %v383
    %1084 = vmatmul.mubr.bf16.gmra.mxu0 %v382
    %v1085 = vpop.f32.mrf.mxu0
    %v1086 = vadd.f32 %v893, %v1085
    %v1087 = vpop.f32.mrf.mxu0
    %v1088 = vadd.f32 %v895, %v1087
    %v1089 = vpop.f32.mrf.mxu0
    %v1090 = vadd.f32 %v897, %v1089
    %v1091 = vpop.f32.mrf.mxu0
    %v1092 = vadd.f32 %v899, %v1091
    %1093 = vmatprep.mubr.bf16.mxu0 %v387
    %1094 = vmatmul.mubr.bf16.gmra.mxu0 %v386
    %v1095 = vpop.f32.mrf.mxu0
    %v1096 = vadd.f32 %v903, %v1095
    %v1097 = vpop.f32.mrf.mxu0
    %v1098 = vadd.f32 %v905, %v1097
    %v1099 = vpop.f32.mrf.mxu0
    %v1100 = vadd.f32 %v907, %v1099
    %v1101 = vpop.f32.mrf.mxu0
    %v1102 = vadd.f32 %v909, %v1101
    %1103 = vmatprep.mubr.bf16.mxu0 %v391
    %1104 = vmatmul.mubr.bf16.gmra.mxu0 %v390
    %v1105 = vpop.f32.mrf.mxu0
    %v1106 = vadd.f32 %v913, %v1105
    %v1107 = vpop.f32.mrf.mxu0
    %v1108 = vadd.f32 %v915, %v1107
    %v1109 = vpop.f32.mrf.mxu0
    %v1110 = vadd.f32 %v917, %v1109
    %v1111 = vpop.f32.mrf.mxu0
    %v1112 = vadd.f32 %v919, %v1111
    %1113 = vmatprep.mubr.bf16.mxu0 %v395
    %1114 = vmatmul.mubr.bf16.gmra.mxu0 %v394
    %v1115 = vpop.f32.mrf.mxu0
    %v1116 = vadd.f32 %v923, %v1115
    %v1117 = vpop.f32.mrf.mxu0
    %v1118 = vadd.f32 %v925, %v1117
    %v1119 = vpop.f32.mrf.mxu0
    %v1120 = vadd.f32 %v927, %v1119
    %v1121 = vpop.f32.mrf.mxu0
    %v1122 = vadd.f32 %v929, %v1121
    %1123 = vmatprep.mubr.bf16.mxu0 %v399
    %1124 = vmatmul.mubr.bf16.gmra.mxu0 %v398
    %v1125 = vpop.f32.mrf.mxu0
    %v1126 = vadd.f32 %v933, %v1125
    %v1127 = vpop.f32.mrf.mxu0
    %v1128 = vadd.f32 %v935, %v1127
    %v1129 = vpop.f32.mrf.mxu0
    %v1130 = vadd.f32 %v937, %v1129
    %v1131 = vpop.f32.mrf.mxu0
    %v1132 = vadd.f32 %v939, %v1131
    %1133 = vmatprep.mubr.bf16.mxu0 %v403
    %1134 = vmatmul.mubr.bf16.gmra.mxu0 %v402
    %v1135 = vpop.f32.mrf.mxu0
    %v1136 = vadd.f32 %v943, %v1135
    %v1137 = vpop.f32.mrf.mxu0
    %v1138 = vadd.f32 %v945, %v1137
    %v1139 = vpop.f32.mrf.mxu0
    %v1140 = vadd.f32 %v947, %v1139
    %v1141 = vpop.f32.mrf.mxu0
    %v1142 = vadd.f32 %v949, %v1141
    %1143 = vmatprep.mubr.bf16.mxu0 %v407
    %1144 = vmatmul.mubr.bf16.gmra.mxu0 %v406
    %v1145 = vpop.f32.mrf.mxu0
    %v1146 = vadd.f32 %v953, %v1145
    %v1147 = vpop.f32.mrf.mxu0
    %v1148 = vadd.f32 %v955, %v1147
    %v1149 = vpop.f32.mrf.mxu0
    %v1150 = vadd.f32 %v957, %v1149
    %v1151 = vpop.f32.mrf.mxu0
    %v1152 = vadd.f32 %v959, %v1151
    %1153 = vmatprep.mubr.bf16.mxu0 %v411
    %1154 = vmatmul.mubr.bf16.gmra.mxu0 %v410
    %v1155 = vpop.f32.mrf.mxu0
    %v1156 = vadd.f32 %v963, %v1155
    %v1157 = vpop.f32.mrf.mxu0
    %v1158 = vadd.f32 %v965, %v1157
    %v1159 = vpop.f32.mrf.mxu0
    %v1160 = vadd.f32 %v967, %v1159
    %v1161 = vpop.f32.mrf.mxu0
    %v1162 = vadd.f32 %v969, %v1161
    %1163 = vmatprep.mubr.bf16.mxu0 %v415
    %1164 = vmatmul.mubr.bf16.gmra.mxu0 %v414
    %v1165 = vpop.f32.mrf.mxu0
    %v1166 = vadd.f32 %v973, %v1165
    %v1167 = vpop.f32.mrf.mxu0
    %v1168 = vadd.f32 %v975, %v1167
    %v1169 = vpop.f32.mrf.mxu0
    %v1170 = vadd.f32 %v977, %v1169
    %v1171 = vpop.f32.mrf.mxu0
    %v1172 = vadd.f32 %v979, %v1171
    %1173 = vmatprep.mubr.bf16.mxu0 %v419
    %1174 = vmatmul.mubr.bf16.gmra.mxu0 %v418
    %v1175 = vpop.f32.mrf.mxu0
    %v1176 = vadd.f32 %v983, %v1175
    %v1177 = vpop.f32.mrf.mxu0
    %v1178 = vadd.f32 %v985, %v1177
    %v1179 = vpop.f32.mrf.mxu0
    %v1180 = vadd.f32 %v987, %v1179
    %v1181 = vpop.f32.mrf.mxu0
    %v1182 = vadd.f32 %v989, %v1181
    %1183 = vmatprep.mubr.bf16.mxu0 %v423
    %1184 = vmatmul.mubr.bf16.gmra.mxu0 %v422
    %v1185 = vpop.f32.mrf.mxu0
    %v1186 = vadd.f32 %v993, %v1185
    %v1187 = vpop.f32.mrf.mxu0
    %v1188 = vadd.f32 %v995, %v1187
    %v1189 = vpop.f32.mrf.mxu0
    %v1190 = vadd.f32 %v997, %v1189
    %v1191 = vpop.f32.mrf.mxu0
    %v1192 = vadd.f32 %v999, %v1191
    %1193 = vdwg.mxu0
    %v1194 = vpack.c.bf16 %v1040, %v1036
    %v1195 = vpack.c.bf16 %v1042, %v1038
    %v1196 = vpack.c.bf16 %v1050, %v1046
    %v1197 = vpack.c.bf16 %v1052, %v1048
    %v1198 = vpack.c.bf16 %v1060, %v1056
    %v1199 = vpack.c.bf16 %v1062, %v1058
    %v1200 = vpack.c.bf16 %v1070, %v1066
    %v1201 = vpack.c.bf16 %v1072, %v1068
    %v1202 = vpack.c.bf16 %v1080, %v1076
    %v1203 = vpack.c.bf16 %v1082, %v1078
    %v1204 = vpack.c.bf16 %v1090, %v1086
    %v1205 = vpack.c.bf16 %v1092, %v1088
    %v1206 = vpack.c.bf16 %v1100, %v1096
    %v1207 = vpack.c.bf16 %v1102, %v1098
    %v1208 = vpack.c.bf16 %v1110, %v1106
    %v1209 = vpack.c.bf16 %v1112, %v1108
    %v1210 = vpack.c.bf16 %v1120, %v1116
    %v1211 = vpack.c.bf16 %v1122, %v1118
    %v1212 = vpack.c.bf16 %v1130, %v1126
    %v1213 = vpack.c.bf16 %v1132, %v1128
    %v1214 = vpack.c.bf16 %v1140, %v1136
    %v1215 = vpack.c.bf16 %v1142, %v1138
    %v1216 = vpack.c.bf16 %v1150, %v1146
    %v1217 = vpack.c.bf16 %v1152, %v1148
    %v1218 = vpack.c.bf16 %v1160, %v1156
    %v1219 = vpack.c.bf16 %v1162, %v1158
    %v1220 = vpack.c.bf16 %v1170, %v1166
    %v1221 = vpack.c.bf16 %v1172, %v1168
    %v1222 = vpack.c.bf16 %v1180, %v1176
    %v1223 = vpack.c.bf16 %v1182, %v1178
    %v1224 = vpack.c.bf16 %v1190, %v1186
    %v1225 = vpack.c.bf16 %v1192, %v1188
    %v1258 = vunpack.c.l.b16 %v1194
    %v1259 = vunpack.c.l.b16 %v1195
    %v1260 = vunpack.c.h.b16 %v1194
    %v1261 = vunpack.c.h.b16 %v1195
    %v1262 = vunpack.c.l.b16 %v1196
    %v1263 = vunpack.c.l.b16 %v1197
    %v1264 = vunpack.c.h.b16 %v1196
    %v1265 = vunpack.c.h.b16 %v1197
    %v1266 = vunpack.c.l.b16 %v1198
    %v1267 = vunpack.c.l.b16 %v1199
    %v1268 = vunpack.c.h.b16 %v1198
    %v1269 = vunpack.c.h.b16 %v1199
    %v1270 = vunpack.c.l.b16 %v1200
    %v1271 = vunpack.c.l.b16 %v1201
    %v1272 = vunpack.c.h.b16 %v1200
    %v1273 = vunpack.c.h.b16 %v1201
    %v1274 = vunpack.c.l.b16 %v1202
    %v1275 = vunpack.c.l.b16 %v1203
    %v1276 = vunpack.c.h.b16 %v1202
    %v1277 = vunpack.c.h.b16 %v1203
    %v1278 = vunpack.c.l.b16 %v1204
    %v1279 = vunpack.c.l.b16 %v1205
    %v1280 = vunpack.c.h.b16 %v1204
    %v1281 = vunpack.c.h.b16 %v1205
    %v1282 = vunpack.c.l.b16 %v1206
    %v1283 = vunpack.c.l.b16 %v1207
    %v1284 = vunpack.c.h.b16 %v1206
    %v1285 = vunpack.c.h.b16 %v1207
    %v1286 = vunpack.c.l.b16 %v1208
    %v1287 = vunpack.c.l.b16 %v1209
    %v1288 = vunpack.c.h.b16 %v1208
    %v1289 = vunpack.c.h.b16 %v1209
    %v1290 = vunpack.c.l.b16 %v1210
    %v1291 = vunpack.c.l.b16 %v1211
    %v1292 = vunpack.c.h.b16 %v1210
    %v1293 = vunpack.c.h.b16 %v1211
    %v1294 = vunpack.c.l.b16 %v1212
    %v1295 = vunpack.c.l.b16 %v1213
    %v1296 = vunpack.c.h.b16 %v1212
    %v1297 = vunpack.c.h.b16 %v1213
    %v1298 = vunpack.c.l.b16 %v1214
    %v1299 = vunpack.c.l.b16 %v1215
    %v1300 = vunpack.c.h.b16 %v1214
    %v1301 = vunpack.c.h.b16 %v1215
    %v1302 = vunpack.c.l.b16 %v1216
    %v1303 = vunpack.c.l.b16 %v1217
    %v1304 = vunpack.c.h.b16 %v1216
    %v1305 = vunpack.c.h.b16 %v1217
    %v1306 = vunpack.c.l.b16 %v1218
    %v1307 = vunpack.c.l.b16 %v1219
    %v1308 = vunpack.c.h.b16 %v1218
    %v1309 = vunpack.c.h.b16 %v1219
    %v1310 = vunpack.c.l.b16 %v1220
    %v1311 = vunpack.c.l.b16 %v1221
    %v1312 = vunpack.c.h.b16 %v1220
    %v1313 = vunpack.c.h.b16 %v1221
    %v1314 = vunpack.c.l.b16 %v1222
    %v1315 = vunpack.c.l.b16 %v1223
    %v1316 = vunpack.c.h.b16 %v1222
    %v1317 = vunpack.c.h.b16 %v1223
    %v1318 = vunpack.c.l.b16 %v1224
    %v1319 = vunpack.c.l.b16 %v1225
    %v1320 = vunpack.c.h.b16 %v1224
    %v1321 = vunpack.c.h.b16 %v1225
    %v1322 = vpack.c.b16 %v1259, %v1258
    %v1323 = vpack.c.b16 %v1261, %v1260
    %v1324 = vpack.c.b16 %v1263, %v1262
    %v1325 = vpack.c.b16 %v1265, %v1264
    %v1326 = vpack.c.b16 %v1267, %v1266
    %v1327 = vpack.c.b16 %v1269, %v1268
    %v1328 = vpack.c.b16 %v1271, %v1270
    %v1329 = vpack.c.b16 %v1273, %v1272
    %v1330 = vpack.c.b16 %v1275, %v1274
    %v1331 = vpack.c.b16 %v1277, %v1276
    %v1332 = vpack.c.b16 %v1279, %v1278
    %v1333 = vpack.c.b16 %v1281, %v1280
    %v1334 = vpack.c.b16 %v1283, %v1282
    %v1335 = vpack.c.b16 %v1285, %v1284
    %v1336 = vpack.c.b16 %v1287, %v1286
    %v1337 = vpack.c.b16 %v1289, %v1288
    %v1338 = vpack.c.b16 %v1291, %v1290
    %v1339 = vpack.c.b16 %v1293, %v1292
    %v1340 = vpack.c.b16 %v1295, %v1294
    %v1341 = vpack.c.b16 %v1297, %v1296
    %v1342 = vpack.c.b16 %v1299, %v1298
    %v1343 = vpack.c.b16 %v1301, %v1300
    %v1344 = vpack.c.b16 %v1303, %v1302
    %v1345 = vpack.c.b16 %v1305, %v1304
    %v1346 = vpack.c.b16 %v1307, %v1306
    %v1347 = vpack.c.b16 %v1309, %v1308
    %v1348 = vpack.c.b16 %v1311, %v1310
    %v1349 = vpack.c.b16 %v1313, %v1312
    %v1350 = vpack.c.b16 %v1315, %v1314
    %v1351 = vpack.c.b16 %v1317, %v1316
    %v1352 = vpack.c.b16 %v1319, %v1318
    %v1353 = vpack.c.b16 %v1321, %v1320
    %1386 = vst [vmem:[#allocation7] sm:$0xff] %v1322
    %1387 = vst [vmem:[#allocation7 + $0x8] sm:$0xff] %v1323
    %1388 = vst [vmem:[#allocation7 + $0x10] sm:$0xff] %v1324
    %1389 = vst [vmem:[#allocation7 + $0x18] sm:$0xff] %v1325
    %1390 = vst [vmem:[#allocation7 + $0x20] sm:$0xff] %v1326
    %1391 = vst [vmem:[#allocation7 + $0x28] sm:$0xff] %v1327
    %1392 = vst [vmem:[#allocation7 + $0x30] sm:$0xff] %v1328
    %1393 = vst [vmem:[#allocation7 + $0x38] sm:$0xff] %v1329
    %1394 = vst [vmem:[#allocation7 + $0x40] sm:$0xff] %v1330
    %1395 = vst [vmem:[#allocation7 + $0x48] sm:$0xff] %v1331
    %1396 = vst [vmem:[#allocation7 + $0x50] sm:$0xff] %v1332
    %1397 = vst [vmem:[#allocation7 + $0x58] sm:$0xff] %v1333
    %1398 = vst [vmem:[#allocation7 + $0x60] sm:$0xff] %v1334
    %1399 = vst [vmem:[#allocation7 + $0x68] sm:$0xff] %v1335
    %1400 = vst [vmem:[#allocation7 + $0x70] sm:$0xff] %v1336
    %1401 = vst [vmem:[#allocation7 + $0x78] sm:$0xff] %v1337
    %1402 = vst [vmem:[#allocation7 + $0x80] sm:$0xff] %v1338
    %1403 = vst [vmem:[#allocation7 + $0x88] sm:$0xff] %v1339
    %1404 = vst [vmem:[#allocation7 + $0x90] sm:$0xff] %v1340
    %1405 = vst [vmem:[#allocation7 + $0x98] sm:$0xff] %v1341
    %1406 = vst [vmem:[#allocation7 + $0xa0] sm:$0xff] %v1342
    %1407 = vst [vmem:[#allocation7 + $0xa8] sm:$0xff] %v1343
    %1408 = vst [vmem:[#allocation7 + $0xb0] sm:$0xff] %v1344
    %1409 = vst [vmem:[#allocation7 + $0xb8] sm:$0xff] %v1345
    %1410 = vst [vmem:[#allocation7 + $0xc0] sm:$0xff] %v1346
    %1411 = vst [vmem:[#allocation7 + $0xc8] sm:$0xff] %v1347
    %1412 = vst [vmem:[#allocation7 + $0xd0] sm:$0xff] %v1348
    %1413 = vst [vmem:[#allocation7 + $0xd8] sm:$0xff] %v1349
    %1414 = vst [vmem:[#allocation7 + $0xe0] sm:$0xff] %v1350
    %1415 = vst [vmem:[#allocation7 + $0xe8] sm:$0xff] %v1351
    %1416 = vst [vmem:[#allocation7 + $0xf0] sm:$0xff] %v1352
    %1417 = vst [vmem:[#allocation7 + $0xf8] sm:$0xff] %v1353
    // Predicated region
    $region18: #{tpu_custom_call.1} parent=1 // pred_check
      _
    $region19: #{tpu_custom_call.1} parent=1 // pred_check_branch
      %1419 = sbr.rel (0) target = $region21
    $region20: #{tpu_custom_call.1} parent=1 // pred_region
      %s1421 = ssub.s32 4096, 4096
      %1422 = vsyncadd [#allocation4], %s1421
      %s1423 = sshll.u32 [#allocation7], 4
      %s1424 = int_to_ptr.vmem [resolvable:$true] %s1423
      %1429 = dma.vmem_to_hbm [thread:$0]  %s1424, 4096, %s2, [#allocation4], 128, 128, 8
    $region21: #{tpu_custom_call.1} parent=1 // pred_fallthru
      _
    // Predicated region
    $region22: #{tpu_custom_call.1} parent=1 // pred_check
      _
    $region23: #{tpu_custom_call.1} parent=1 // pred_check_branch
      %1431 = sbr.rel (0) target = $region25
    $region24: #{tpu_custom_call.1} parent=1 // pred_region
      %1432 = dma.done [#allocation4], 4096
    $region25: #{tpu_custom_call.1} parent=1 // pred_fallthru
      _
    %1433 = vsyncpa [#allocation3], 1
    %1434 = vsyncpa [#allocation6], 1
    %1435 = vsyncpa [#allocation4], 1

</llo_original>
